<compile_context>
chip_gen: v6e
topology: v6e:2x2x1
jax: 0.10.0
libtpu: 0.0.40
codegen_flags: <defaults>
</compile_context>

<pallas_src>
import numpy as np
import jax
import jax.numpy as jnp
from jax import lax
from jax.experimental import pallas as pl
from jax.experimental.pallas import tpu as pltpu

EPS = 1e-5
_TAPS = tuple((kh - 1, kw - 1) for kh in range(3) for kw in range(3))  # 3x3 conv taps


def _vmem():
    return pl.BlockSpec(memory_space=pltpu.MemorySpace.VMEM)


# --------------------------- constant tables (wrapper) -----------------------

def _conv_pad_masks(B, H, W):
    """(9, B*H*W) 0/1 masks: validity of tap (dh,dw) at each flattened position."""
    n = np.arange(B * H * W)
    h = (n % (H * W)) // W
    w = n % W
    rows = []
    for kh in range(3):
        for kw in range(3):
            dh, dw = kh - 1, kw - 1
            ok = (h + dh >= 0) & (h + dh < H) & (w + dw >= 0) & (w + dw < W)
            rows.append(ok.astype(np.float32))
    return np.stack(rows)


def _pool2_select(B, H, W):
    """(B*H*W, B*(H/2)*(W/2)) selection matrix for MaxPool2d(2,2) top-left picks."""
    Ho, Wo = H // 2, W // 2
    S = np.zeros((B * H * W, B * Ho * Wo), np.float32)
    for b in range(B):
        for ho in range(Ho):
            for wo in range(Wo):
                S[b * H * W + 2 * ho * W + 2 * wo, b * Ho * Wo + ho * Wo + wo] = 1.0
    return S


def _pool1_select(B, H, W):
    """(B*(H-1)*(W-1), B*H*W) selection for MaxPool2d(2,1); rows ordered (spatial, batch)."""
    Ho, Wo = H - 1, W - 1
    S = np.zeros((Ho * Wo * B, B * H * W), np.float32)
    for s in range(Ho * Wo):
        ho, wo = divmod(s, Wo)
        for b in range(B):
            S[s * B + b, b * H * W + ho * W + wo] = 1.0
    return S


# ------------------------------- fused kernel --------------------------------

def _make_kernel(roll_is_jnp):
    """Build the fused forward kernel.  `roll_is_jnp` selects the pltpu.roll sign
    convention (probed on-device once) so that shift(x, d)[i] == x[(i + d) mod n]."""

    def shift(x, d, axis):
        n = x.shape[axis]
        d = d % n
        if d == 0:
            return x
        amt = (-d) % n if roll_is_jnp else d
        return pltpu.roll(x, amt, axis=axis)

    def kernel(x_ref, bn0s_ref, bn0t_ref,
               w1_ref, s1_ref, t1_ref, mk1_ref, S1_ref,
               w2_ref, s2_ref, t2_ref, mk2_ref, S2T_ref,
               w3_ref, s3_ref, t3_ref, mk3_ref, S3_ref,
               fw1_ref, fb1_ref, fw2_ref, fb2_ref, fw3_ref, fb3_ref,
               o_ref):
        f32 = jnp.float32

        def conv_cm(x, w_ref, mk_ref, W):
            # channel-major conv: x (Cin, N) -> (Cout, N); lane axis = b*H*W + h*W + w
            cout = w_ref.shape[1]
            acc = jnp.zeros((cout, x.shape[1]), f32)
            for k, (dh, dw) in enumerate(_TAPS):
                xs = shift(x, dh * W + dw, axis=1)
                if (dh, dw) != (0, 0):
                    xs = xs * mk_ref[k]                 # zero-padding mask (1, N)
                acc = acc + jnp.dot(w_ref[k], xs, preferred_element_type=f32)
            return acc

        def window_max(y, W, axis):
            # elementwise max over the 2x2 window anchored at each position
            m = y
            for d in (1, W, W + 1):
                m = jnp.maximum(m, shift(y, d, axis=axis))
            return m

        # ---- bn0 (eval-mode affine) + conv1/bn1/relu + MaxPool2d(2,2) ----
        x = x_ref[...] * bn0s_ref[...] + bn0t_ref[...]                        # (Ci, B*256)
        y1 = conv_cm(x, w1_ref, mk1_ref, 16)
        y1 = jnp.maximum(y1 * s1_ref[...] + t1_ref[...], 0.0)
        a1 = jnp.dot(window_max(y1, 16, axis=1), S1_ref[...],
                     preferred_element_type=f32)                              # (Ci, B*64)

        # ---- conv2/bn2/relu + MaxPool2d(2,2) ----
        y2 = conv_cm(a1, w2_ref, mk2_ref, 8)
        y2 = jnp.maximum(y2 * s2_ref[...] + t2_ref[...], 0.0)
        m2 = window_max(y2, 8, axis=1)                                        # (2Ci, B*64)
        # pooled and switched to row-major (spatial-on-sublanes): a2t = S2T @ m2^T
        a2t = lax.dot_general(S2T_ref[...], m2, (((1,), (1,)), ((), ())),
                              preferred_element_type=f32)                     # (B*16, 2Ci)

        # ---- conv3/bn3/relu + MaxPool2d(2,1) in row-major layout ----
        cout3 = w3_ref.shape[2]
        acc3 = jnp.zeros((a2t.shape[0], cout3), f32)
        for k, (dh, dw) in enumerate(_TAPS):
            xs = shift(a2t, dh * 4 + dw, axis=0)
            if (dh, dw) != (0, 0):
                xs = xs * mk3_ref[k]                                          # (B*16, 1)
            acc3 = acc3 + jnp.dot(xs, w3_ref[k], preferred_element_type=f32)
        y3 = jnp.maximum(acc3 * s3_ref[...] + t3_ref[...], 0.0)               # (B*16, 3Ci)
        m3 = window_max(y3, 4, axis=0)
        a3 = jnp.dot(S3_ref[...], m3, preferred_element_type=f32)             # (9*B, 3Ci)

        # ---- fc1 -> relu -> fc2 -> relu -> fc3 -> softmax (dropout = identity) ----
        # TODO(synk): dropout layers are identity here (eval/inference mode);
        # BatchNorm uses running statistics (eval mode), not per-batch stats.
        B = a3.shape[0] // 9
        h1 = jnp.zeros((B, fw1_ref.shape[2]), f32)
        for s in range(9):  # flattened 3x3 pooled map; fc1 weights pre-grouped per s
            h1 = h1 + jnp.dot(a3[s * B:(s + 1) * B, :], fw1_ref[s],
                              preferred_element_type=f32)
        h1 = jnp.maximum(h1 + fb1_ref[...], 0.0)
        h2 = jnp.maximum(jnp.dot(h1, fw2_ref[...], preferred_element_type=f32)
                         + fb2_ref[...], 0.0)
        logits = jnp.dot(h2, fw3_ref[...], preferred_element_type=f32) + fb3_ref[...]
        mx = jnp.max(logits, axis=1, keepdims=True)
        e = jnp.exp(logits - mx)
        o_ref[...] = e * pl.reciprocal(jnp.sum(e, axis=1, keepdims=True), approx=True)

    return kernel


def make_forward(roll_is_jnp):
    kernel = _make_kernel(roll_is_jnp)

    def forward(x_nchw, prep):
        B, Ci, H, W = x_nchw.shape
        # layout plumbing only: channel-major, lane-dense (Ci, B*H*W)
        x_cm = jnp.transpose(x_nchw, (1, 0, 2, 3)).reshape(Ci, B * H * W)
        n_classes = prep[-1].shape[1]
        call = pl.pallas_call(
            kernel,
            out_shape=jax.ShapeDtypeStruct((B, n_classes), jnp.float32),
            in_specs=[_vmem() for _ in range(1 + len(prep))],
            out_specs=_vmem(),
        )
        return call(x_cm, *prep)

    return jax.jit(forward)


# --------------------------- parameters & preparation ------------------------

def init_params(key, Ci=3, C=10, K=3):
    """Random parameters in PyTorch layouts (conv: (Cout,Cin,K,K), fc: (out,in))."""
    ks = iter(jax.random.split(key, 64))

    def nrm(shape, s=0.15):
        return s * jax.random.normal(next(ks), shape, jnp.float32)

    def pos(shape):
        return 0.5 + jax.random.uniform(next(ks), shape, jnp.float32)

    def bn(c):
        return dict(gamma=pos((c,)), beta=nrm((c,)), mean=nrm((c,)), var=pos((c,)))

    p = {'bn0': bn(Ci)}
    for i, (cin, cout) in enumerate([(Ci, Ci), (Ci, 2 * Ci), (2 * Ci, 3 * Ci)], 1):
        p[f'conv{i}'] = dict(weight=nrm((cout, cin, K, K)), bias=nrm((cout,)))
        p[f'bn{i}'] = bn(cout)
    d_in = 3 * Ci * (16 // 2 // 2 - 1) ** 2                      # = 81
    p['fc1'] = dict(weight=nrm((48, d_in)), bias=nrm((48,)))
    p['fc2'] = dict(weight=nrm((24, 48)), bias=nrm((24,)))
    p['fc3'] = dict(weight=nrm((C, 24)), bias=nrm((C,)))
    return p


def prepare(params, B):
    """Fold eval-mode BatchNorms, rearrange weights into kernel layouts, and build
    the constant padding masks / pooling selection matrices."""

    def fold(bnp, bias=None):
        s = bnp['gamma'] / jnp.sqrt(bnp['var'] + EPS)
        t = bnp['beta'] - bnp['mean'] * s if bias is None else bnp['beta'] + s * (bias - bnp['mean'])
        return s, t

    def conv_w_cm(w):   # (Cout,Cin,3,3) -> (9, Cout, Cin), tap k = kh*3+kw
        return jnp.transpose(w, (2, 3, 0, 1)).reshape(9, w.shape[0], w.shape[1])

    def conv_w_rm(w):   # (Cout,Cin,3,3) -> (9, Cin, Cout)
        return jnp.transpose(w, (2, 3, 1, 0)).reshape(9, w.shape[1], w.shape[0])

    s0, t0 = fold(params['bn0'])
    s1, t1 = fold(params['bn1'], params['conv1']['bias'])
    s2, t2 = fold(params['bn2'], params['conv2']['bias'])
    s3, t3 = fold(params['bn3'], params['conv3']['bias'])

    # fc1 weights regrouped per spatial position s = ho*3+wo of the pooled 3x3 map:
    # fw1s[s, c, j] = fc1.weight[j, c*9 + s]  (matches torch's NCHW-order flatten)
    nch3 = params['conv3']['weight'].shape[0]
    h1dim = params['fc1']['weight'].shape[0]
    fw1s = jnp.transpose(jnp.transpose(params['fc1']['weight']).reshape(nch3, 9, h1dim),
                         (1, 0, 2))

    return (
        s0.reshape(-1, 1), t0.reshape(-1, 1),
        conv_w_cm(params['conv1']['weight']), s1.reshape(-1, 1), t1.reshape(-1, 1),
        jnp.asarray(_conv_pad_masks(B, 16, 16)[:, None, :]),      # (9, 1, B*256)
        jnp.asarray(_pool2_select(B, 16, 16)),                    # (B*256, B*64)
        conv_w_cm(params['conv2']['weight']), s2.reshape(-1, 1), t2.reshape(-1, 1),
        jnp.asarray(_conv_pad_masks(B, 8, 8)[:, None, :]),        # (9, 1, B*64)
        jnp.asarray(_pool2_select(B, 8, 8).T),                    # (B*16, B*64)
        conv_w_rm(params['conv3']['weight']), s3.reshape(1, -1), t3.reshape(1, -1),
        jnp.asarray(_conv_pad_masks(B, 4, 4)[:, :, None]),        # (9, B*16, 1)
        jnp.asarray(_pool1_select(B, 4, 4)),                      # (9*B, B*16)
        fw1s, params['fc1']['bias'].reshape(1, -1),
        jnp.transpose(params['fc2']['weight']), params['fc2']['bias'].reshape(1, -1),
        jnp.transpose(params['fc3']['weight']), params['fc3']['bias'].reshape(1, -1),
    )


# ----------------------- one-time pltpu.roll convention probe ----------------

def _roll_is_jnp_convention():
    def probe(x_ref, o_ref):
        o_ref[...] = pltpu.roll(x_ref[...], 1, axis=1)

    x = jnp.tile(jnp.arange(128.0, dtype=jnp.float32)[None, :], (8, 1))
    out = pl.pallas_call(
        probe,
        out_shape=jax.ShapeDtypeStruct((8, 128), jnp.float32),
        in_specs=[_vmem()],
        out_specs=_vmem(),
    )(x)
    return bool(jnp.allclose(out, jnp.roll(x, 1, axis=1)))


# ------------------------------------ main ------------------------------------

if __name__ == "__main__":
    key = jax.random.PRNGKey(0)
    k_params, k_x = jax.random.split(key)

    B, Ci, Hdim, Wdim, C = 2, 3, 16, 16, 10   # Ci=3 implied by the hard-coded flatten (81)
    params = init_params(k_params, Ci=Ci, C=C)
    prep = prepare(params, B)
    x = jax.random.normal(k_x, (B, Ci, Hdim, Wdim), jnp.float32)

    fwd = make_forward(_roll_is_jnp_convention())
    out = jax.block_until_ready(fwd(x, prep))

    assert out.shape == (B, C)
    assert bool(jnp.all(jnp.isfinite(out)))
    # softmax rows sum to ~1 (loose tolerance because of the approx EUP reciprocal)
    assert bool(jnp.allclose(jnp.sum(out, axis=1), 1.0, atol=1e-2))
    print("KERNEL_OK")
</pallas_src>

<mosaic_0001>
module attributes {stable_mosaic.version = 11 : i64} {
  func.func @probe(%arg0: memref<8x128xf32, #tpu.memory_space<vmem>>, %arg1: memref<8x128xf32, #tpu.memory_space<vmem>>) attributes {dimension_semantics = [], scalar_prefetch = 0 : i64, scratch_operands = 0 : i64, tpu.core_type = #tpu.core_type<tc>} {
    %c0 = arith.constant 0 : index
    %c0_0 = arith.constant 0 : index
    %0 = vector.load %arg0[%c0, %c0_0] : memref<8x128xf32, #tpu.memory_space<vmem>>, vector<8x128xf32>
    %c1_i32 = arith.constant 1 : i32
    %1 = tpu.dynamic_rotate %0 by %c1_i32 dim 1 : vector<8x128xf32>, i32 -> vector<8x128xf32>
    %c0_1 = arith.constant 0 : index
    %c0_2 = arith.constant 0 : index
    %2 = vector.load %arg1[%c0_1, %c0_2] : memref<8x128xf32, #tpu.memory_space<vmem>>, vector<8x128xf32>
    tpu.vector_store %arg1[%c0_1, %c0_2], %1 {strides = array<i32>} : memref<8x128xf32, #tpu.memory_space<vmem>>, vector<8x128xf32>,
    return
  }
}

</mosaic_0001>

<llo_original>
// kernel: tpu_custom_call.1
$region0: #{tpu_custom_call.1}
  #allocation0 [shape = 'u32[]', space=smem, size = 0x4, offset = 0x4, fixed_abs, tag = 'smem constant byte address 0x4 - core index']
  #allocation1 [shape = 'u32[144,128]{1,0:T(1,128)}', space=vmem, size = 0x12000, scoped, tag = 'internal scratch']
  %s0 = inlined_call_operand.hbm [shape: f32[8,128], index: 0, kind: input, shape index: {}]
  %s1 = inlined_call_operand.hbm [shape: f32[8,128], index: 1, kind: output, shape index: {}]
  %s2 = sld [smem:[#allocation0]]
  $region18: #{tpu_custom_call.1} parent=0
    _
  %s4 = ssub.s32 1, %s2
  %s5 = scalar_select 0, %s4, %s2
  $region1: #{tpu_custom_call.1} parent=0
    #allocation2 [shape = 'u8[4096]{0}', space=vmem, size = 0x1000, scoped, tag = 'input window, operand 0, single buffered']
    #allocation3 [shape = 's32[1]{0}', space=sflag, size = 0x4, scoped, tag = 'scoped memory for tpu_custom_call.1']
    #allocation4 [shape = 's32[1]{0}', space=sflag, size = 0x4, scoped, tag = 'scoped memory for tpu_custom_call.1']
    #allocation5 [shape = 'u8[4096]{0}', space=vmem, size = 0x1000, scoped, tag = 'output window, operand 0, single buffered']
    %6 = vsyncpa [#allocation3], 0
    %7 = vsyncpa [#allocation4], 0
    // Predicated region
    $region2: #{tpu_custom_call.1} parent=1 // pred_check
      _
    $region3: #{tpu_custom_call.1} parent=1 // pred_check_branch
      %9 = sbr.rel (0) target = $region5
    $region4: #{tpu_custom_call.1} parent=1 // pred_region
      %s11 = ssub.s32 128, 128
      %12 = vsyncadd [#allocation3], %s11
      %s14 = sshll.u32 [#allocation2], 4
      %s15 = int_to_ptr.vmem [resolvable:$true] %s14
      %17 = dma.hbm_to_vmem [thread:$0]  %s0, 128, %s15, [#allocation3]
    $region5: #{tpu_custom_call.1} parent=1 // pred_fallthru
      _
    // Predicated region
    $region6: #{tpu_custom_call.1} parent=1 // pred_check
      _
    $region7: #{tpu_custom_call.1} parent=1 // pred_check_branch
      %19 = sbr.rel (0) target = $region9
    $region8: #{tpu_custom_call.1} parent=1 // pred_region
      %20 = dma.done [#allocation3], 128
    $region9: #{tpu_custom_call.1} parent=1 // pred_fallthru
      _
    %v21 = vld [vmem:[#allocation2] sm:$0xff]
    %22 = vrot.lane.b32.xlu0 %v21, 1
    %v23 = vpop.permute.xlu0 %22
    %24 = vst [vmem:[#allocation5] sm:$0xff] %v23
    // Predicated region
    $region10: #{tpu_custom_call.1} parent=1 // pred_check
      _
    $region11: #{tpu_custom_call.1} parent=1 // pred_check_branch
      %26 = sbr.rel (0) target = $region13
    $region12: #{tpu_custom_call.1} parent=1 // pred_region
      %s28 = ssub.s32 128, 128
      %29 = vsyncadd [#allocation4], %s28
      %s31 = sshll.u32 [#allocation5], 4
      %s32 = int_to_ptr.vmem [resolvable:$true] %s31
      %34 = dma.vmem_to_hbm [thread:$0]  %s32, 128, %s1, [#allocation4]
    $region13: #{tpu_custom_call.1} parent=1 // pred_fallthru
      _
    // Predicated region
    $region14: #{tpu_custom_call.1} parent=1 // pred_check
      _
    $region15: #{tpu_custom_call.1} parent=1 // pred_check_branch
      %36 = sbr.rel (0) target = $region17
    $region16: #{tpu_custom_call.1} parent=1 // pred_region
      %37 = dma.done [#allocation4], 128
    $region17: #{tpu_custom_call.1} parent=1 // pred_fallthru
      _
    %38 = vsyncpa [#allocation3], 1
    %39 = vsyncpa [#allocation4], 1

</llo_original>
